<compile_context>
chip_gen: v5e
topology: v5e:2x2
jax: 0.10.0
libtpu: 0.0.40
codegen_flags: <defaults>
</compile_context>

<pallas_src>
import jax
import jax.numpy as jnp
from jax.experimental import pallas as pl
from jax.experimental.pallas import tpu as pltpu

_LANE = 128     # vreg lane width   -> last-dim granularity
_SUBLANE = 8    # vreg sublane rows -> second-to-last-dim granularity


def _round_up(n, m):
    return ((n + m - 1) // m) * m


def _mlp_kernel(x_ref, w1_ref, b1_ref, w2_ref, b2_ref, w3_ref, b3_ref, o_ref):
    """Fused relu(relu(x@W1+b1)@W2+b2)@W3+b3 on one batch tile (all VMEM)."""
    cdt = w1_ref.dtype  # MXU input dtype (bf16 or f32); accumulation is f32.

    x = x_ref[...].astype(cdt)
    h = jnp.dot(x, w1_ref[...], preferred_element_type=jnp.float32)
    h = jnp.maximum(h + b1_ref[...], 0.0)

    h = jnp.dot(h.astype(cdt), w2_ref[...], preferred_element_type=jnp.float32)
    h = jnp.maximum(h + b2_ref[...], 0.0)

    o_ref[...] = (
        jnp.dot(h.astype(cdt), w3_ref[...], preferred_element_type=jnp.float32)
        + b3_ref[...]
    ).astype(o_ref.dtype)


def prepare_params(params, *, use_bf16=True):
    """One-time pad/cast of weights & biases to kernel layout (call once, reuse).

    Weights are cast to the MXU input dtype and padded to lane-dense output
    dims; the first layer keeps its logical input dim (so x stays unpadded).
    Biases stay f32 (added to the f32 accumulator on the VPU).
    """
    cdt = jnp.bfloat16 if use_bf16 else jnp.float32

    def pad2(a, rows, cols, dtype):
        a = jnp.asarray(a, dtype)
        if a.ndim == 1:
            a = a.reshape(1, -1)
        return jnp.pad(a, ((0, rows - a.shape[0]), (0, cols - a.shape[1])))

    in_f, h1 = params["w1"].shape
    h2 = params["w2"].shape[1]
    out = params["w3"].shape[1]
    h1_p, h2_p, out_p = (_round_up(h1, _LANE), _round_up(h2, _LANE),
                         _round_up(out, _LANE))
    return {
        "w1": pad2(params["w1"], in_f, h1_p, cdt),
        "b1": pad2(params["b1"], 1, h1_p, jnp.float32),
        "w2": pad2(params["w2"], h1_p, h2_p, cdt),
        "b2": pad2(params["b2"], 1, h2_p, jnp.float32),
        "w3": pad2(params["w3"], h2_p, out_p, cdt),
        "b3": pad2(params["b3"], 1, out_p, jnp.float32),
    }


def make_linear_ddqn_forward(input_size, hidden_size1, hidden_size2, output_size,
                             *, max_tile_b=1024, num_tensorcores=2):
    """Returns a jitted forward(x, prepared_params) -> [batch, output_size] f32."""
    h1_p = _round_up(hidden_size1, _LANE)
    h2_p = _round_up(hidden_size2, _LANE)
    out_p = _round_up(output_size, _LANE)

    def forward(x, prepared):
        if x.dtype not in (jnp.float32, jnp.bfloat16):
            x = x.astype(jnp.float32)
        batch, in_f = x.shape

        # --- balanced batch tiling (bounded pad waste, >=2 steps for megacore) ---
        num_tiles = pl.cdiv(batch, max_tile_b)
        if batch >= num_tensorcores * _SUBLANE:
            # Even number of grid steps so both v7x TensorCores get equal work.
            num_tiles = _round_up(max(num_tiles, num_tensorcores), num_tensorcores)
        tile_b = _round_up(pl.cdiv(batch, num_tiles), _SUBLANE)

        # Only pad batch to a sublane multiple (<= 7 rows); partial last blocks
        # in the grid are handled by Pallas (reads padded, OOB writes dropped).
        batch_p = _round_up(batch, _SUBLANE)
        if batch_p != batch:
            x = jnp.pad(x, ((0, batch_p - batch), (0, 0)))
        grid = (pl.cdiv(batch_p, tile_b),)

        # --- honest cost hint from logical (unpadded) dims ---
        cdt = prepared["w1"].dtype
        w_elems = (input_size * hidden_size1 + hidden_size1 * hidden_size2
                   + hidden_size2 * output_size)
        flops = 2 * batch * w_elems
        bytes_accessed = (
            batch * input_size * x.dtype.itemsize            # x
            + w_elems * jnp.dtype(cdt).itemsize               # weights
            + (hidden_size1 + hidden_size2 + output_size) * 4  # biases (f32)
            + batch * output_size * 4                          # out (f32)
        )

        out_padded = pl.pallas_call(
            _mlp_kernel,
            out_shape=jax.ShapeDtypeStruct((batch_p, out_p), jnp.float32),
            grid=grid,
            in_specs=[
                # activations: streamed over the batch grid, logical feature dim
                pl.BlockSpec((tile_b, in_f), lambda i: (i, 0)),
                # weights / biases: constant index_map -> VMEM-resident across grid.
                # TODO(synk): add pipeline_mode=pl.Buffered(1) here if hidden sizes
                # ever grow enough for double-buffered weight copies to matter.
                pl.BlockSpec((in_f, h1_p), lambda i: (0, 0)),
                pl.BlockSpec((1, h1_p), lambda i: (0, 0)),
                pl.BlockSpec((h1_p, h2_p), lambda i: (0, 0)),
                pl.BlockSpec((1, h2_p), lambda i: (0, 0)),
                pl.BlockSpec((h2_p, out_p), lambda i: (0, 0)),
                pl.BlockSpec((1, out_p), lambda i: (0, 0)),
            ],
            out_specs=pl.BlockSpec((tile_b, out_p), lambda i: (i, 0)),
            compiler_params=pltpu.CompilerParams(
                dimension_semantics=("parallel",),
            ),
            cost_estimate=pl.CostEstimate(
                flops=flops, transcendentals=0, bytes_accessed=bytes_accessed
            ),
        )(x, prepared["w1"], prepared["b1"], prepared["w2"], prepared["b2"],
          prepared["w3"], prepared["b3"])

        # Strip batch + lane padding back to the logical shape.
        return out_padded[:batch, :output_size]

    return jax.jit(forward)


def init_linear_ddqn_params(key, input_size, hidden_size1, hidden_size2, output_size):
    """Deterministic init mimicking nn.Linear's U(-1/sqrt(fan_in), 1/sqrt(fan_in))."""
    def linear_init(k, fan_in, fan_out):
        kw, kb = jax.random.split(k)
        bound = 1.0 / jnp.sqrt(jnp.float32(fan_in))
        # stored as [in, out] so kernel does x @ W (same math as PyTorch x @ W_pt.T)
        w = jax.random.uniform(kw, (fan_in, fan_out), jnp.float32, -bound, bound)
        b = jax.random.uniform(kb, (1, fan_out), jnp.float32, -bound, bound)
        return w, b

    k1, k2, k3 = jax.random.split(key, 3)
    w1, b1 = linear_init(k1, input_size, hidden_size1)
    w2, b2 = linear_init(k2, hidden_size1, hidden_size2)
    w3, b3 = linear_init(k3, hidden_size2, output_size)
    return {"w1": w1, "b1": b1, "w2": w2, "b2": b2, "w3": w3, "b3": b3}


def _reference_forward(x, p):
    h1 = jnp.maximum(x @ p["w1"] + p["b1"], 0.0)
    h2 = jnp.maximum(h1 @ p["w2"] + p["b2"], 0.0)
    return h2 @ p["w3"] + p["b3"]


if __name__ == "__main__":
    # Shapes consistent with the module: input_size=(16,), h1=32, h2=32, out=4
    batch = 2
    input_size, hidden1, hidden2, output_size = 16, 32, 32, 4

    key = jax.random.PRNGKey(0)
    k_params, k_x, k_x2 = jax.random.split(key, 3)

    params = init_linear_ddqn_params(k_params, input_size, hidden1, hidden2, output_size)
    x = jax.random.normal(k_x, (batch, input_size), jnp.float32)
    ref = _reference_forward(x, params)

    fwd = make_linear_ddqn_forward(input_size, hidden1, hidden2, output_size)

    # Default path: bf16 MXU inputs, f32 accumulation / bias / ReLU.
    prep_bf16 = prepare_params(params, use_bf16=True)
    actions = jax.block_until_ready(fwd(x, prep_bf16))
    assert actions.shape == (batch, output_size)
    assert jnp.allclose(actions, ref, atol=5e-2, rtol=5e-2)

    # Full-f32 MXU path: tight match vs plain-JAX reference.
    prep_f32 = prepare_params(params, use_bf16=False)
    actions_f32 = jax.block_until_ready(fwd(x, prep_f32))
    assert actions_f32.shape == (batch, output_size)
    assert jnp.allclose(actions_f32, ref, atol=1e-4, rtol=1e-4)

    # Multi-tile / partial-block path (grid of 2 "parallel" steps -> both v7x TCs).
    x_big = jax.random.normal(k_x2, (24, input_size), jnp.float32)
    ref_big = _reference_forward(x_big, params)
    actions_big = jax.block_until_ready(fwd(x_big, prep_bf16))
    assert actions_big.shape == (24, output_size)
    assert jnp.allclose(actions_big, ref_big, atol=5e-2, rtol=5e-2)

    print("KERNEL_OK")
</pallas_src>

<mosaic_0001>
module attributes {stable_mosaic.version = 11 : i64} {
  func.func @_mlp_kernel(%arg0: i32, %arg1: memref<8x16xf32, #tpu.memory_space<vmem>>, %arg2: memref<16x128xbf16, #tpu.memory_space<vmem>>, %arg3: memref<1x128xf32, #tpu.memory_space<vmem>>, %arg4: memref<128x128xbf16, #tpu.memory_space<vmem>>, %arg5: memref<1x128xf32, #tpu.memory_space<vmem>>, %arg6: memref<128x128xbf16, #tpu.memory_space<vmem>>, %arg7: memref<1x128xf32, #tpu.memory_space<vmem>>, %arg8: memref<8x128xf32, #tpu.memory_space<vmem>>) attributes {dimension_semantics = [#tpu.dimension_semantics<parallel>], iteration_bounds = array<i64: 1>, scalar_prefetch = 0 : i64, scratch_operands = 0 : i64, tpu.core_type = #tpu.core_type<tc>, window_params = [{transform_indices = @transform_0, window_bounds = array<i64: 8, 16>}, {pipeline_mode = #tpu.pipeline_mode<synchronous>, transform_indices = @transform_1, window_bounds = array<i64: 16, 128>}, {pipeline_mode = #tpu.pipeline_mode<synchronous>, transform_indices = @transform_2, window_bounds = array<i64: 1, 128>}, {pipeline_mode = #tpu.pipeline_mode<synchronous>, transform_indices = @transform_3, window_bounds = array<i64: 128, 128>}, {pipeline_mode = #tpu.pipeline_mode<synchronous>, transform_indices = @transform_4, window_bounds = array<i64: 1, 128>}, {pipeline_mode = #tpu.pipeline_mode<synchronous>, transform_indices = @transform_5, window_bounds = array<i64: 128, 128>}, {pipeline_mode = #tpu.pipeline_mode<synchronous>, transform_indices = @transform_6, window_bounds = array<i64: 1, 128>}, {transform_indices = @transform_7, window_bounds = array<i64: 8, 128>}]} {
    %c0 = arith.constant 0 : index
    %c0_0 = arith.constant 0 : index
    %0 = vector.load %arg1[%c0, %c0_0] : memref<8x16xf32, #tpu.memory_space<vmem>>, vector<8x16xf32>
    %1 = arith.truncf %0 : vector<8x16xf32> to vector<8x16xbf16>
    %c0_1 = arith.constant 0 : index
    %c0_2 = arith.constant 0 : index
    %2 = vector.load %arg2[%c0_1, %c0_2] : memref<16x128xbf16, #tpu.memory_space<vmem>>, vector<16x128xbf16>
    %cst = arith.constant dense<0.000000e+00> : vector<8x128xf32>
    %3 = tpu.matmul %1, %2, %cst {dimension_numbers = #tpu.dot_dimension_numbers<[1], [0], [0], [1], [0, 0, 1, 1], [], []>} : vector<8x16xbf16>, vector<16x128xbf16>, vector<8x128xf32> -> vector<8x128xf32>
    %c0_3 = arith.constant 0 : index
    %c0_4 = arith.constant 0 : index
    %4 = vector.load %arg3[%c0_3, %c0_4] : memref<1x128xf32, #tpu.memory_space<vmem>>, vector<1x128xf32>
    %5 = vector.broadcast %4 : vector<1x128xf32> to vector<8x128xf32>
    %6 = arith.addf %3, %5 : vector<8x128xf32>
    %cst_5 = arith.constant 0.000000e+00 : f32
    %7 = vector.broadcast %cst_5 : f32 to vector<8x128xf32>
    %8 = arith.maximumf %6, %7 : vector<8x128xf32>
    %9 = arith.truncf %8 : vector<8x128xf32> to vector<8x128xbf16>
    %c0_6 = arith.constant 0 : index
    %c0_7 = arith.constant 0 : index
    %10 = vector.load %arg4[%c0_6, %c0_7] : memref<128x128xbf16, #tpu.memory_space<vmem>>, vector<128x128xbf16>
    %cst_8 = arith.constant dense<0.000000e+00> : vector<8x128xf32>
    %11 = tpu.matmul %9, %10, %cst_8 {dimension_numbers = #tpu.dot_dimension_numbers<[1], [0], [0], [1], [0, 0, 1, 1], [], []>} : vector<8x128xbf16>, vector<128x128xbf16>, vector<8x128xf32> -> vector<8x128xf32>
    %c0_9 = arith.constant 0 : index
    %c0_10 = arith.constant 0 : index
    %12 = vector.load %arg5[%c0_9, %c0_10] : memref<1x128xf32, #tpu.memory_space<vmem>>, vector<1x128xf32>
    %13 = vector.broadcast %12 : vector<1x128xf32> to vector<8x128xf32>
    %14 = arith.addf %11, %13 : vector<8x128xf32>
    %cst_11 = arith.constant 0.000000e+00 : f32
    %15 = vector.broadcast %cst_11 : f32 to vector<8x128xf32>
    %16 = arith.maximumf %14, %15 : vector<8x128xf32>
    %17 = arith.truncf %16 : vector<8x128xf32> to vector<8x128xbf16>
    %c0_12 = arith.constant 0 : index
    %c0_13 = arith.constant 0 : index
    %18 = vector.load %arg6[%c0_12, %c0_13] : memref<128x128xbf16, #tpu.memory_space<vmem>>, vector<128x128xbf16>
    %cst_14 = arith.constant dense<0.000000e+00> : vector<8x128xf32>
    %19 = tpu.matmul %17, %18, %cst_14 {dimension_numbers = #tpu.dot_dimension_numbers<[1], [0], [0], [1], [0, 0, 1, 1], [], []>} : vector<8x128xbf16>, vector<128x128xbf16>, vector<8x128xf32> -> vector<8x128xf32>
    %c0_15 = arith.constant 0 : index
    %c0_16 = arith.constant 0 : index
    %20 = vector.load %arg7[%c0_15, %c0_16] : memref<1x128xf32, #tpu.memory_space<vmem>>, vector<1x128xf32>
    %21 = vector.broadcast %20 : vector<1x128xf32> to vector<8x128xf32>
    %22 = arith.addf %19, %21 : vector<8x128xf32>
    %c0_17 = arith.constant 0 : index
    %c0_18 = arith.constant 0 : index
    %23 = vector.load %arg8[%c0_17, %c0_18] : memref<8x128xf32, #tpu.memory_space<vmem>>, vector<8x128xf32>
    tpu.vector_store %arg8[%c0_17, %c0_18], %22 {strides = array<i32>} : memref<8x128xf32, #tpu.memory_space<vmem>>, vector<8x128xf32>,
    return
  }
  func.func @transform_0(%arg0: i32) -> (i32, i32) {
    %c0_i32 = arith.constant 0 : i32
    %c0_i32_0 = arith.constant 0 : i32
    return %arg0, %c0_i32 : i32, i32
  }
  func.func @transform_1(%arg0: i32) -> (i32, i32) {
    %c0_i32 = arith.constant 0 : i32
    %c0_i32_0 = arith.constant 0 : i32
    %c0_i32_1 = arith.constant 0 : i32
    return %c0_i32, %c0_i32_0 : i32, i32
  }
  func.func @transform_2(%arg0: i32) -> (i32, i32) {
    %c0_i32 = arith.constant 0 : i32
    %c0_i32_0 = arith.constant 0 : i32
    %c0_i32_1 = arith.constant 0 : i32
    return %c0_i32, %c0_i32_0 : i32, i32
  }
  func.func @transform_3(%arg0: i32) -> (i32, i32) {
    %c0_i32 = arith.constant 0 : i32
    %c0_i32_0 = arith.constant 0 : i32
    %c0_i32_1 = arith.constant 0 : i32
    return %c0_i32, %c0_i32_0 : i32, i32
  }
  func.func @transform_4(%arg0: i32) -> (i32, i32) {
    %c0_i32 = arith.constant 0 : i32
    %c0_i32_0 = arith.constant 0 : i32
    %c0_i32_1 = arith.constant 0 : i32
    return %c0_i32, %c0_i32_0 : i32, i32
  }
  func.func @transform_5(%arg0: i32) -> (i32, i32) {
    %c0_i32 = arith.constant 0 : i32
    %c0_i32_0 = arith.constant 0 : i32
    %c0_i32_1 = arith.constant 0 : i32
    return %c0_i32, %c0_i32_0 : i32, i32
  }
  func.func @transform_6(%arg0: i32) -> (i32, i32) {
    %c0_i32 = arith.constant 0 : i32
    %c0_i32_0 = arith.constant 0 : i32
    %c0_i32_1 = arith.constant 0 : i32
    return %c0_i32, %c0_i32_0 : i32, i32
  }
  func.func @transform_7(%arg0: i32) -> (i32, i32) {
    %c0_i32 = arith.constant 0 : i32
    %c0_i32_0 = arith.constant 0 : i32
    return %arg0, %c0_i32 : i32, i32
  }
}

</mosaic_0001>

<llo_original>
// kernel: forward.1
$region0: #{forward.1}
  #allocation0 [shape = 'u32[]', space=smem, size = 0x4, offset = 0x4, fixed_abs, tag = 'smem constant byte address 0x4 - core index']
  #allocation1 [shape = 'u32[72,128]{1,0:T(1,128)}', space=vmem, size = 0x9000, scoped, tag = 'internal scratch']
  %s0 = inlined_call_operand.vmem [shape: f32[8,16], index: 0, kind: input, shape index: {}]
  %s1 = inlined_call_operand.vmem [shape: bf16[16,128], index: 1, kind: input, shape index: {}]
  %s2 = inlined_call_operand.vmem [shape: f32[1,128], index: 2, kind: input, shape index: {}]
  %s3 = inlined_call_operand.hbm [shape: bf16[128,128], index: 3, kind: input, shape index: {}]
  %s4 = inlined_call_operand.vmem [shape: f32[1,128], index: 4, kind: input, shape index: {}]
  %s5 = inlined_call_operand.hbm [shape: bf16[128,128], index: 5, kind: input, shape index: {}]
  %s6 = inlined_call_operand.vmem [shape: f32[1,128], index: 6, kind: input, shape index: {}]
  %s7 = inlined_call_operand.vmem [shape: f32[8,128], index: 7, kind: output, shape index: {}]
  %s8 = sld [smem:[#allocation0]]
  $region46: #{forward.1} parent=0
    _
  %s10 = ssub.s32 1, %s8
  %s11 = scalar_select 0, %s10, %s8
  $region1: #{forward.1} parent=0
    #allocation2 [shape = 'u8[32768]{0}', space=vmem, size = 0x8000, scoped, tag = 'input window, operand 3, single buffered']
    #allocation3 [shape = 's32[1]{0}', space=sflag, size = 0x4, scoped, tag = 'scoped memory for forward.1']
    #allocation4 [shape = 'u8[32768]{0}', space=vmem, size = 0x8000, scoped, tag = 'input window, operand 5, single buffered']
    #allocation5 [shape = 's32[1]{0}', space=sflag, size = 0x4, scoped, tag = 'scoped memory for forward.1']
    %12 = vsyncpa [#allocation3], 0
    %13 = vsyncpa [#allocation5], 0
    // Predicated region
    $region2: #{forward.1} parent=1 // pred_check
      _
    $region3: #{forward.1} parent=1 // pred_check_branch
      %15 = sbr.rel (0) target = $region5
    $region4: #{forward.1} parent=1 // pred_region
      _
    $region5: #{forward.1} parent=1 // pred_fallthru
      _
    // Predicated region
    $region6: #{forward.1} parent=1 // pred_check
      _
    $region7: #{forward.1} parent=1 // pred_check_branch
      %17 = sbr.rel (0) target = $region9
    $region8: #{forward.1} parent=1 // pred_region
      _
    $region9: #{forward.1} parent=1 // pred_fallthru
      _
    // Predicated region
    $region10: #{forward.1} parent=1 // pred_check
      _
    $region11: #{forward.1} parent=1 // pred_check_branch
      %19 = sbr.rel (0) target = $region13
    $region12: #{forward.1} parent=1 // pred_region
      _
    $region13: #{forward.1} parent=1 // pred_fallthru
      _
    // Predicated region
    $region14: #{forward.1} parent=1 // pred_check
      _
    $region15: #{forward.1} parent=1 // pred_check_branch
      %21 = sbr.rel (0) target = $region17
    $region16: #{forward.1} parent=1 // pred_region
      %23 = vsyncadd [#allocation3], 0
      %s24 = sshll.u32 %s3, 4
      %s25 = int_to_ptr.hbm [resolvable:$true] %s24
      %s26 = sshll.u32 [#allocation2], 4
      %s27 = int_to_ptr.vmem [resolvable:$true] %s26
      %32 = dma.hbm_to_vmem [thread:$0]  %s25, 1024, %s27, [#allocation3], 64, 64, 4
    $region17: #{forward.1} parent=1 // pred_fallthru
      _
    // Predicated region
    $region18: #{forward.1} parent=1 // pred_check
      _
    $region19: #{forward.1} parent=1 // pred_check_branch
      %34 = sbr.rel (0) target = $region21
    $region20: #{forward.1} parent=1 // pred_region
      _
    $region21: #{forward.1} parent=1 // pred_fallthru
      _
    // Predicated region
    $region22: #{forward.1} parent=1 // pred_check
      _
    $region23: #{forward.1} parent=1 // pred_check_branch
      %36 = sbr.rel (0) target = $region25
    $region24: #{forward.1} parent=1 // pred_region
      %38 = vsyncadd [#allocation5], 0
      %s39 = sshll.u32 %s5, 4
      %s40 = int_to_ptr.hbm [resolvable:$true] %s39
      %s41 = sshll.u32 [#allocation4], 4
      %s42 = int_to_ptr.vmem [resolvable:$true] %s41
      %47 = dma.hbm_to_vmem [thread:$0]  %s40, 1024, %s42, [#allocation5], 64, 64, 4
    $region25: #{forward.1} parent=1 // pred_fallthru
      _
    // Predicated region
    $region26: #{forward.1} parent=1 // pred_check
      _
    $region27: #{forward.1} parent=1 // pred_check_branch
      %49 = sbr.rel (0) target = $region29
    $region28: #{forward.1} parent=1 // pred_region
      _
    $region29: #{forward.1} parent=1 // pred_fallthru
      _
    // Predicated region
    $region30: #{forward.1} parent=1 // pred_check
      _
    $region31: #{forward.1} parent=1 // pred_check_branch
      %51 = sbr.rel (0) target = $region33
    $region32: #{forward.1} parent=1 // pred_region
      %53 = dma.done [#allocation3], 1024
    $region33: #{forward.1} parent=1 // pred_fallthru
      _
    // Predicated region
    $region34: #{forward.1} parent=1 // pred_check
      _
    $region35: #{forward.1} parent=1 // pred_check_branch
      %55 = sbr.rel (0) target = $region37
    $region36: #{forward.1} parent=1 // pred_region
      %57 = dma.done [#allocation5], 1024
    $region37: #{forward.1} parent=1 // pred_fallthru
      _
    %v59 = vld [vmem:[%s0] sm:$0xff]
    %v60 = vpack.c.bf16 %v59, %v59
    %v61 = vld [vmem:[%s1] sm:$0xf]
    %v62 = vld [vmem:[%s1 + $0x4] sm:$0xf]
    %v63 = vld [vmem:[%s2] sm:$0x1]
    %v65 = vperm.slane %v63, 0
    %v69 = vunpack.c.l.b16 %v61
    %v70 = vunpack.c.l.b16 %v62
    %v71 = vpack.c.b16 %v70, %v69
    %vm73 = vcmask 130048
    %v75 = vsel %vm73, %v60, 0
    %77 = vmatpush.bf16.msra.mxu0 0
    %78 = vmatpush.bf16.msra.mxu0 0
    %79 = vmatpush.bf16.msra.mxu0 0
    %80 = vmatpush.bf16.msra.mxu0 0
    %81 = vmatpush.bf16.msra.mxu0 0
    %82 = vmatpush.bf16.msra.mxu0 0
    %83 = vmatpush.bf16.msra.mxu0 0
    %84 = vmatpush.bf16.msra.mxu0 %v71
    %85 = vmatmul.bf16.gmra.mxu0 %v75
    %v86 = vpop.f32.mrf.mxu0
    %v87 = vadd.f32 %v65, %v86
    %v88 = vpop.f32.mrf.mxu0
    %89 = vdwg.mxu0
    %v90 = vmax.f32 %v87, 0.0
    %v91 = vpack.c.bf16 %v90, %v90
    %v92 = vld [vmem:[#allocation2] sm:$0xf]
    %v93 = vld [vmem:[#allocation2 + $0x4] sm:$0xf]
    %v94 = vld [vmem:[#allocation2 + $0x8] sm:$0xf]
    %v95 = vld [vmem:[#allocation2 + $0xc] sm:$0xf]
    %v96 = vld [vmem:[#allocation2 + $0x10] sm:$0xf]
    %v97 = vld [vmem:[#allocation2 + $0x14] sm:$0xf]
    %v98 = vld [vmem:[#allocation2 + $0x18] sm:$0xf]
    %v99 = vld [vmem:[#allocation2 + $0x1c] sm:$0xf]
    %v100 = vld [vmem:[#allocation2 + $0x20] sm:$0xf]
    %v101 = vld [vmem:[#allocation2 + $0x24] sm:$0xf]
    %v102 = vld [vmem:[#allocation2 + $0x28] sm:$0xf]
    %v103 = vld [vmem:[#allocation2 + $0x2c] sm:$0xf]
    %v104 = vld [vmem:[#allocation2 + $0x30] sm:$0xf]
    %v105 = vld [vmem:[#allocation2 + $0x34] sm:$0xf]
    %v106 = vld [vmem:[#allocation2 + $0x38] sm:$0xf]
    %v107 = vld [vmem:[#allocation2 + $0x3c] sm:$0xf]
    %v108 = vld [vmem:[%s4] sm:$0x1]
    %v110 = vperm.slane %v108, 0
    %v128 = vunpack.c.l.b16 %v92
    %v129 = vunpack.c.l.b16 %v93
    %v130 = vunpack.c.l.b16 %v94
    %v131 = vunpack.c.l.b16 %v95
    %v132 = vunpack.c.l.b16 %v96
    %v133 = vunpack.c.l.b16 %v97
    %v134 = vunpack.c.l.b16 %v98
    %v135 = vunpack.c.l.b16 %v99
    %v136 = vunpack.c.l.b16 %v100
    %v137 = vunpack.c.l.b16 %v101
    %v138 = vunpack.c.l.b16 %v102
    %v139 = vunpack.c.l.b16 %v103
    %v140 = vunpack.c.l.b16 %v104
    %v141 = vunpack.c.l.b16 %v105
    %v142 = vunpack.c.l.b16 %v106
    %v143 = vunpack.c.l.b16 %v107
    %v144 = vpack.c.b16 %v129, %v128
    %v145 = vpack.c.b16 %v131, %v130
    %v146 = vpack.c.b16 %v133, %v132
    %v147 = vpack.c.b16 %v135, %v134
    %v148 = vpack.c.b16 %v137, %v136
    %v149 = vpack.c.b16 %v139, %v138
    %v150 = vpack.c.b16 %v141, %v140
    %v151 = vpack.c.b16 %v143, %v142
    %160 = vmatpush.bf16.msra.mxu0 %v151
    %161 = vmatpush.bf16.msra.mxu0 %v150
    %162 = vmatpush.bf16.msra.mxu0 %v149
    %163 = vmatpush.bf16.msra.mxu0 %v148
    %164 = vmatpush.bf16.msra.mxu0 %v147
    %165 = vmatpush.bf16.msra.mxu0 %v146
    %166 = vmatpush.bf16.msra.mxu0 %v145
    %167 = vmatpush.bf16.msra.mxu0 %v144
    %168 = vmatmul.bf16.gmra.mxu0 %v91
    %v169 = vpop.f32.mrf.mxu0
    %v170 = vadd.f32 %v110, %v169
    %v171 = vpop.f32.mrf.mxu0
    %172 = vdwg.mxu0
    %v173 = vmax.f32 %v170, 0.0
    %v174 = vpack.c.bf16 %v173, %v173
    %v175 = vld [vmem:[#allocation4] sm:$0xf]
    %v176 = vld [vmem:[#allocation4 + $0x4] sm:$0xf]
    %v177 = vld [vmem:[#allocation4 + $0x8] sm:$0xf]
    %v178 = vld [vmem:[#allocation4 + $0xc] sm:$0xf]
    %v179 = vld [vmem:[#allocation4 + $0x10] sm:$0xf]
    %v180 = vld [vmem:[#allocation4 + $0x14] sm:$0xf]
    %v181 = vld [vmem:[#allocation4 + $0x18] sm:$0xf]
    %v182 = vld [vmem:[#allocation4 + $0x1c] sm:$0xf]
    %v183 = vld [vmem:[#allocation4 + $0x20] sm:$0xf]
    %v184 = vld [vmem:[#allocation4 + $0x24] sm:$0xf]
    %v185 = vld [vmem:[#allocation4 + $0x28] sm:$0xf]
    %v186 = vld [vmem:[#allocation4 + $0x2c] sm:$0xf]
    %v187 = vld [vmem:[#allocation4 + $0x30] sm:$0xf]
    %v188 = vld [vmem:[#allocation4 + $0x34] sm:$0xf]
    %v189 = vld [vmem:[#allocation4 + $0x38] sm:$0xf]
    %v190 = vld [vmem:[#allocation4 + $0x3c] sm:$0xf]
    %v191 = vld [vmem:[%s6] sm:$0x1]
    %v193 = vperm.slane %v191, 0
    %v211 = vunpack.c.l.b16 %v175
    %v212 = vunpack.c.l.b16 %v176
    %v213 = vunpack.c.l.b16 %v177
    %v214 = vunpack.c.l.b16 %v178
    %v215 = vunpack.c.l.b16 %v179
    %v216 = vunpack.c.l.b16 %v180
    %v217 = vunpack.c.l.b16 %v181
    %v218 = vunpack.c.l.b16 %v182
    %v219 = vunpack.c.l.b16 %v183
    %v220 = vunpack.c.l.b16 %v184
    %v221 = vunpack.c.l.b16 %v185
    %v222 = vunpack.c.l.b16 %v186
    %v223 = vunpack.c.l.b16 %v187
    %v224 = vunpack.c.l.b16 %v188
    %v225 = vunpack.c.l.b16 %v189
    %v226 = vunpack.c.l.b16 %v190
    %v227 = vpack.c.b16 %v212, %v211
    %v228 = vpack.c.b16 %v214, %v213
    %v229 = vpack.c.b16 %v216, %v215
    %v230 = vpack.c.b16 %v218, %v217
    %v231 = vpack.c.b16 %v220, %v219
    %v232 = vpack.c.b16 %v222, %v221
    %v233 = vpack.c.b16 %v224, %v223
    %v234 = vpack.c.b16 %v226, %v225
    %243 = vmatpush.bf16.msra.mxu0 %v234
    %244 = vmatpush.bf16.msra.mxu0 %v233
    %245 = vmatpush.bf16.msra.mxu0 %v232
    %246 = vmatpush.bf16.msra.mxu0 %v231
    %247 = vmatpush.bf16.msra.mxu0 %v230
    %248 = vmatpush.bf16.msra.mxu0 %v229
    %249 = vmatpush.bf16.msra.mxu0 %v228
    %250 = vmatpush.bf16.msra.mxu0 %v227
    %251 = vmatmul.bf16.gmra.mxu0 %v174
    %v252 = vpop.f32.mrf.mxu0
    %v253 = vadd.f32 %v193, %v252
    %v254 = vpop.f32.mrf.mxu0
    %255 = vdwg.mxu0
    %256 = vst [vmem:[%s7] sm:$0xff] %v253
    // Predicated region
    $region38: #{forward.1} parent=1 // pred_check
      _
    $region39: #{forward.1} parent=1 // pred_check_branch
      %258 = sbr.rel (0) target = $region41
    $region40: #{forward.1} parent=1 // pred_region
      _
    $region41: #{forward.1} parent=1 // pred_fallthru
      _
    // Predicated region
    $region42: #{forward.1} parent=1 // pred_check
      _
    $region43: #{forward.1} parent=1 // pred_check_branch
      %260 = sbr.rel (0) target = $region45
    $region44: #{forward.1} parent=1 // pred_region
      _
    $region45: #{forward.1} parent=1 // pred_fallthru
      _
    %261 = vsyncpa [#allocation3], 1
    %262 = vsyncpa [#allocation5], 1

</llo_original>
